<compile_context>
chip_gen: v6e
topology: v6e:2x2x1
jax: 0.10.0
libtpu: 0.0.40
codegen_flags: <defaults>
</compile_context>

<pallas_src>
import functools

import jax
import jax.numpy as jnp
from jax.experimental import pallas as pl
from jax.experimental.pallas import tpu as pltpu


def _stddev_concat_kernel(x_ref, o_ref, *, C, F, HW):
    # x_ref: [G, km, C*HW]   (G = group size, km = groups handled this step)
    # o_ref: [G, km, (C+F)*HW]
    x = x_ref[...]
    G, km, CHW = x.shape
    c_hw = (C // F) * HW  # flattened (C//F, H, W) extent per new feature

    # Statistic in float32 (matches the reference numerics).  The f32 working set
    # is accounted for in the wrapper's VMEM budget when choosing the block size.
    y = x.astype(jnp.float32).reshape(G, km, F, c_hw)
    mean = jnp.mean(y, axis=0, keepdims=True)            # [1, km, F, c_hw]
    var = jnp.mean((y - mean) ** 2, axis=0)              # [km, F, c_hw]
    std = jnp.sqrt(var + 1e-8)
    avg = jnp.mean(std, axis=-1)                         # [km, F]

    # Pass-through of the original features: wide, lane-dense store.
    o_ref[:, :, :CHW] = x

    # Broadcast the per-group statistic over the group and spatial dims and write
    # it as the tail of the flattened channel axis (the concat region).
    stat = jnp.broadcast_to(
        avg.astype(o_ref.dtype)[:, :, None], (km, F, HW)
    ).reshape(km, F * HW)
    o_ref[:, :, CHW:] = jnp.broadcast_to(stat[None], (G, km, F * HW))


def _choose_groups_per_step(M, bytes_per_group, budget_bytes):
    """Pick how many groups (columns of the [G, M, C*HW] layout) per grid step."""
    divisors = [d for d in range(1, M + 1) if M % d == 0]
    fitting = [d for d in divisors if d * bytes_per_group <= budget_bytes] or [1]
    # Prefer sublane-aligned block heights (or the full axis) for clean tiling.
    aligned = [d for d in fitting if d == M or d % 8 == 0]
    pool = aligned or fitting
    km = max(pool)
    # Keep >= 2 grid steps when affordable so v7x can use both TensorCores.
    two_step = [d for d in pool if M // d >= 2]
    if M >= 2 and two_step and (M // km) < 2:
        km = max(two_step)
    return km


def concat_minibatch_stddev(
    x, group_size=4, num_new_features=1, *, vmem_budget_bytes=4 * 1024 * 1024
):
    N, C, H, W = x.shape
    G = min(group_size, N)
    assert N % G == 0, "batch must be divisible by group size"
    F = num_new_features
    assert C % F == 0, "channels must be divisible by num_new_features"

    M = N // G
    HW = H * W
    CHW = C * HW
    OHW = (C + F) * HW
    itemsize = jnp.dtype(x.dtype).itemsize

    # Strided-group layout: batch n = g*M + m; the reference reduces over g for a
    # fixed m, so the [G, M, C*HW] view (pure row-major reshape, no data movement)
    # turns every group into a rectangular [:, m, :] slice.
    x3 = x.reshape(G, M, CHW)

    # VMEM footprint of one group column per step: double-buffered input and
    # output blocks plus the float32 working copy used for the statistic.
    per_group = G * (2 * CHW * itemsize + 2 * OHW * itemsize + CHW * 4)
    km = _choose_groups_per_step(M, per_group, vmem_budget_bytes)
    grid = (M // km,)

    need = km * per_group
    vmem_limit = int(max(min(need + (2 << 20), 100 << 20), 16 << 20))

    out3 = pl.pallas_call(
        functools.partial(_stddev_concat_kernel, C=C, F=F, HW=HW),
        out_shape=jax.ShapeDtypeStruct((G, M, OHW), x.dtype),
        grid=grid,
        in_specs=[pl.BlockSpec((G, km, CHW), lambda t: (0, t, 0))],
        out_specs=pl.BlockSpec((G, km, OHW), lambda t: (0, t, 0)),
        compiler_params=pltpu.CompilerParams(
            dimension_semantics=("parallel",),
            vmem_limit_bytes=vmem_limit,
        ),
    )(x3)

    # (G, M, (C+F)*HW) -> (N, C+F, H, W); pure reshapes, n = g*M + m as above.
    return out3.reshape(N, C + F, H, W)


def _reference(x, group_size=4, num_new_features=1):
    # Pure-JAX reference mirroring the PyTorch forward (strided grouping).
    N, C, H, W = x.shape
    G = min(group_size, N)
    F = num_new_features
    y = x.astype(jnp.float32).reshape(G, N // G, F, C // F, H, W)
    y = y - jnp.mean(y, axis=0, keepdims=True)
    y = jnp.mean(y * y, axis=0)
    y = jnp.sqrt(y + 1e-8)
    y = jnp.mean(y, axis=(2, 3, 4))                       # [N//G, F]
    y = y.reshape(N // G, F, 1, 1)
    y = jnp.tile(y, (G, 1, H, W)).astype(x.dtype)         # [N, F, H, W]
    return jnp.concatenate([x, y], axis=1)


if __name__ == "__main__":
    key = jax.random.PRNGKey(0)

    # N > group_size exercises the strided grouping semantics.
    N, C, H, W = 8, 4, 16, 16
    x = jax.random.normal(key, (N, C, H, W), dtype=jnp.float32)
    out = jax.block_until_ready(concat_minibatch_stddev(x, group_size=4, num_new_features=1))
    ref = _reference(x, group_size=4, num_new_features=1)
    assert out.shape == (N, C + 1, H, W), out.shape
    assert jnp.allclose(out, ref, atol=1e-5, rtol=1e-4), "mismatch vs reference (F=1)"

    # Second config: multiple new features.
    N2, C2, H2, W2 = 8, 8, 8, 8
    x2 = jax.random.normal(jax.random.PRNGKey(1), (N2, C2, H2, W2), dtype=jnp.float32)
    out2 = jax.block_until_ready(concat_minibatch_stddev(x2, group_size=4, num_new_features=2))
    ref2 = _reference(x2, group_size=4, num_new_features=2)
    assert out2.shape == (N2, C2 + 2, H2, W2), out2.shape
    assert jnp.allclose(out2, ref2, atol=1e-5, rtol=1e-4), "mismatch vs reference (F=2)"

    print("KERNEL_OK")
</pallas_src>

<mosaic_0001>
module attributes {stable_mosaic.version = 11 : i64} {
  func.func @_stddev_concat_kernel(%arg0: i32, %arg1: memref<4x2x1024xf32, #tpu.memory_space<vmem>>, %arg2: memref<4x2x1280xf32, #tpu.memory_space<vmem>>) attributes {dimension_semantics = [#tpu.dimension_semantics<parallel>], iteration_bounds = array<i64: 1>, scalar_prefetch = 0 : i64, scratch_operands = 0 : i64, tpu.core_type = #tpu.core_type<tc>, window_params = [{transform_indices = @transform_0, window_bounds = array<i64: 4, 2, 1024>}, {transform_indices = @transform_1, window_bounds = array<i64: 4, 2, 1280>}]} {
    %c0 = arith.constant 0 : index
    %c0_0 = arith.constant 0 : index
    %c0_1 = arith.constant 0 : index
    %0 = vector.load %arg1[%c0, %c0_0, %c0_1] : memref<4x2x1024xf32, #tpu.memory_space<vmem>>, vector<4x2x1024xf32>
    %1 = vector.shape_cast %0 : vector<4x2x1024xf32> to vector<4x2x1x1024xf32>
    %cst = arith.constant dense<0.000000e+00> : vector<2x1x1024xf32>
    %2 = vector.multi_reduction <add>, %1, %cst [0] : vector<4x2x1x1024xf32> to vector<2x1x1024xf32>
    %3 = vector.shape_cast %2 : vector<2x1x1024xf32> to vector<1x2x1x1024xf32>
    %cst_2 = arith.constant 4.000000e+00 : f32
    %4 = vector.broadcast %cst_2 : f32 to vector<1x2x1x1024xf32>
    %5 = arith.divf %3, %4 : vector<1x2x1x1024xf32>
    %6 = vector.broadcast %5 : vector<1x2x1x1024xf32> to vector<4x2x1x1024xf32>
    %7 = arith.subf %1, %6 : vector<4x2x1x1024xf32>
    %8 = arith.mulf %7, %7 : vector<4x2x1x1024xf32>
    %cst_3 = arith.constant dense<0.000000e+00> : vector<2x1x1024xf32>
    %9 = vector.multi_reduction <add>, %8, %cst_3 [0] : vector<4x2x1x1024xf32> to vector<2x1x1024xf32>
    %cst_4 = arith.constant 4.000000e+00 : f32
    %10 = vector.broadcast %cst_4 : f32 to vector<2x1x1024xf32>
    %11 = arith.divf %9, %10 : vector<2x1x1024xf32>
    %cst_5 = arith.constant 9.99999993E-9 : f32
    %12 = vector.broadcast %cst_5 : f32 to vector<2x1x1024xf32>
    %13 = arith.addf %11, %12 : vector<2x1x1024xf32>
    %14 = math.sqrt %13 : vector<2x1x1024xf32>
    %cst_6 = arith.constant dense<0.000000e+00> : vector<2x1xf32>
    %15 = vector.multi_reduction <add>, %14, %cst_6 [2] : vector<2x1x1024xf32> to vector<2x1xf32>
    %cst_7 = arith.constant 1.024000e+03 : f32
    %16 = vector.broadcast %cst_7 : f32 to vector<2x1xf32>
    %17 = arith.divf %15, %16 : vector<2x1xf32>
    %c0_8 = arith.constant 0 : index
    %c0_9 = arith.constant 0 : index
    %c0_10 = arith.constant 0 : index
    %18 = vector.load %arg2[%c0_8, %c0_9, %c0_10] : memref<4x2x1280xf32, #tpu.memory_space<vmem>>, vector<4x2x1024xf32>
    tpu.vector_store %arg2[%c0_8, %c0_9, %c0_10], %0 {strides = array<i32>} : memref<4x2x1280xf32, #tpu.memory_space<vmem>>, vector<4x2x1024xf32>,
    %19 = vector.shape_cast %17 : vector<2x1xf32> to vector<2x1x1xf32>
    %20 = vector.shape_cast %19 : vector<2x1x1xf32> to vector<2x1x1xf32>
    %21 = vector.broadcast %20 : vector<2x1x1xf32> to vector<2x1x256xf32>
    %22 = vector.shape_cast %21 : vector<2x1x256xf32> to vector<2x256xf32>
    %23 = vector.shape_cast %22 : vector<2x256xf32> to vector<1x2x256xf32>
    %24 = vector.shape_cast %23 : vector<1x2x256xf32> to vector<1x2x256xf32>
    %25 = vector.broadcast %24 : vector<1x2x256xf32> to vector<4x2x256xf32>
    %c0_11 = arith.constant 0 : index
    %c0_12 = arith.constant 0 : index
    %c1024 = arith.constant 1024 : index
    %26 = vector.load %arg2[%c0_11, %c0_12, %c1024] : memref<4x2x1280xf32, #tpu.memory_space<vmem>>, vector<4x2x256xf32>
    tpu.vector_store %arg2[%c0_11, %c0_12, %c1024], %25 {strides = array<i32>} : memref<4x2x1280xf32, #tpu.memory_space<vmem>>, vector<4x2x256xf32>,
    return
  }
  func.func @transform_0(%arg0: i32) -> (i32, i32, i32) {
    %c0_i32 = arith.constant 0 : i32
    %c0_i32_0 = arith.constant 0 : i32
    %c0_i32_1 = arith.constant 0 : i32
    return %c0_i32, %arg0, %c0_i32_0 : i32, i32, i32
  }
  func.func @transform_1(%arg0: i32) -> (i32, i32, i32) {
    %c0_i32 = arith.constant 0 : i32
    %c0_i32_0 = arith.constant 0 : i32
    %c0_i32_1 = arith.constant 0 : i32
    return %c0_i32, %arg0, %c0_i32_0 : i32, i32, i32
  }
}

</mosaic_0001>

<llo_original>
// kernel: tpu_custom_call.1
$region0: #{tpu_custom_call.1}
  #allocation0 [shape = 'u32[]', space=smem, size = 0x4, offset = 0x4, fixed_abs, tag = 'smem constant byte address 0x4 - core index']
  #allocation1 [shape = 'u32[144,128]{1,0:T(1,128)}', space=vmem, size = 0x12000, scoped, tag = 'internal scratch']
  %s0 = inlined_call_operand.hbm [shape: f32[4,2,1024], index: 0, kind: input, shape index: {}]
  %s1 = inlined_call_operand.hbm [shape: f32[4,2,1280], index: 1, kind: output, shape index: {}]
  %s2 = sld [smem:[#allocation0]]
  $region18: #{tpu_custom_call.1} parent=0
    _
  %s4 = ssub.s32 1, %s2
  %s5 = scalar_select 0, %s4, %s2
  $region1: #{tpu_custom_call.1} parent=0
    #allocation2 [shape = 'u8[32768]{0}', space=vmem, size = 0x8000, scoped, tag = 'input window, operand 0, single buffered']
    #allocation3 [shape = 's32[1]{0}', space=sflag, size = 0x4, scoped, tag = 'scoped memory for tpu_custom_call.1']
    #allocation4 [shape = 's32[1]{0}', space=sflag, size = 0x4, scoped, tag = 'scoped memory for tpu_custom_call.1']
    #allocation5 [shape = 'u8[40960]{0}', space=vmem, size = 0xa000, scoped, tag = 'output window, operand 0, single buffered']
    %6 = vsyncpa [#allocation3], 0
    %7 = vsyncpa [#allocation4], 0
    // Predicated region
    $region2: #{tpu_custom_call.1} parent=1 // pred_check
      _
    $region3: #{tpu_custom_call.1} parent=1 // pred_check_branch
      %9 = sbr.rel (0) target = $region5
    $region4: #{tpu_custom_call.1} parent=1 // pred_region
      %s11 = ssub.s32 1024, 1024
      %12 = vsyncadd [#allocation3], %s11
      %s13 = sshll.u32 [#allocation2], 4
      %s14 = int_to_ptr.vmem [resolvable:$true] %s13
      %19 = dma.hbm_to_vmem [thread:$0]  %s0, 1024, %s14, [#allocation3], 256, 256, 16
    $region5: #{tpu_custom_call.1} parent=1 // pred_fallthru
      _
    // Predicated region
    $region6: #{tpu_custom_call.1} parent=1 // pred_check
      _
    $region7: #{tpu_custom_call.1} parent=1 // pred_check_branch
      %21 = sbr.rel (0) target = $region9
    $region8: #{tpu_custom_call.1} parent=1 // pred_region
      %22 = dma.done [#allocation3], 1024
    $region9: #{tpu_custom_call.1} parent=1 // pred_fallthru
      _
    %v23 = vld [vmem:[#allocation2] sm:$0xff]
    %v24 = vld [vmem:[#allocation2 + $0x8] sm:$0xff]
    %v25 = vld [vmem:[#allocation2 + $0x10] sm:$0xff]
    %v26 = vld [vmem:[#allocation2 + $0x18] sm:$0xff]
    %v27 = vld [vmem:[#allocation2 + $0x20] sm:$0xff]
    %v28 = vld [vmem:[#allocation2 + $0x28] sm:$0xff]
    %v29 = vld [vmem:[#allocation2 + $0x30] sm:$0xff]
    %v30 = vld [vmem:[#allocation2 + $0x38] sm:$0xff]
    %v40 = vunpack.c.l.s4 1966171168
    %v41 = vunpack.c.0.s8 %v40
    %v42 = vlaneseq
    %v43 = vshrl.u32 %v42, 7
    %v44 = vsub.s32 %v41, %v43
    %v45 = vrot.slane %v23, %v44
    %v47 = vunpack.c.l.s4 1966171168
    %v48 = vunpack.c.0.s8 %v47
    %v49 = vlaneseq
    %v50 = vshrl.u32 %v49, 7
    %v51 = vsub.s32 %v48, %v50
    %v52 = vrot.slane %v24, %v51
    %v53 = vcombine.low %v45, %v52
    %v54 = vcombine.high %v45, %v52
    %v56 = vunpack.c.l.s4 1966171168
    %v57 = vunpack.c.0.s8 %v56
    %v58 = vlaneseq
    %v59 = vshrl.u32 %v58, 7
    %v60 = vsub.s32 %v57, %v59
    %v61 = vrot.slane %v25, %v60
    %v63 = vunpack.c.l.s4 1966171168
    %v64 = vunpack.c.0.s8 %v63
    %v65 = vlaneseq
    %v66 = vshrl.u32 %v65, 7
    %v67 = vsub.s32 %v64, %v66
    %v68 = vrot.slane %v26, %v67
    %v69 = vcombine.low %v61, %v68
    %v70 = vcombine.high %v61, %v68
    %v72 = vunpack.c.l.s4 1966171168
    %v73 = vunpack.c.0.s8 %v72
    %v74 = vlaneseq
    %v75 = vshrl.u32 %v74, 7
    %v76 = vsub.s32 %v73, %v75
    %v77 = vrot.slane %v27, %v76
    %v79 = vunpack.c.l.s4 1966171168
    %v80 = vunpack.c.0.s8 %v79
    %v81 = vlaneseq
    %v82 = vshrl.u32 %v81, 7
    %v83 = vsub.s32 %v80, %v82
    %v84 = vrot.slane %v28, %v83
    %v85 = vcombine.low %v77, %v84
    %v86 = vcombine.high %v77, %v84
    %v88 = vunpack.c.l.s4 1966171168
    %v89 = vunpack.c.0.s8 %v88
    %v90 = vlaneseq
    %v91 = vshrl.u32 %v90, 7
    %v92 = vsub.s32 %v89, %v91
    %v93 = vrot.slane %v29, %v92
    %v95 = vunpack.c.l.s4 1966171168
    %v96 = vunpack.c.0.s8 %v95
    %v97 = vlaneseq
    %v98 = vshrl.u32 %v97, 7
    %v99 = vsub.s32 %v96, %v98
    %v100 = vrot.slane %v30, %v99
    %v101 = vcombine.low %v93, %v100
    %v102 = vcombine.high %v93, %v100
    %v111 = vlaneseq
    %v112 = vshrl.u32 %v111, 7
    %v113 = vsub.s32 0, %v112
    %v114 = vrot.slane %v53, %v113
    %v115 = vlaneseq
    %v116 = vshrl.u32 %v115, 7
    %v117 = vsub.s32 1, %v116
    %v118 = vrot.slane %v53, %v117
    %v119 = vlaneseq
    %v120 = vshrl.u32 %v119, 7
    %v121 = vsub.s32 2, %v120
    %v122 = vrot.slane %v53, %v121
    %v123 = vlaneseq
    %v124 = vshrl.u32 %v123, 7
    %v125 = vsub.s32 3, %v124
    %v126 = vrot.slane %v53, %v125
    %v127 = vlaneseq
    %v128 = vshrl.u32 %v127, 7
    %v129 = vsub.s32 4, %v128
    %v130 = vrot.slane %v53, %v129
    %v131 = vlaneseq
    %v132 = vshrl.u32 %v131, 7
    %v133 = vsub.s32 5, %v132
    %v134 = vrot.slane %v53, %v133
    %v135 = vlaneseq
    %v136 = vshrl.u32 %v135, 7
    %v137 = vsub.s32 6, %v136
    %v138 = vrot.slane %v53, %v137
    %v139 = vlaneseq
    %v140 = vshrl.u32 %v139, 7
    %v141 = vsub.s32 7, %v140
    %v142 = vrot.slane %v53, %v141
    %v143 = vlaneseq
    %v144 = vshrl.u32 %v143, 7
    %v145 = vsub.s32 0, %v144
    %v146 = vrot.slane %v54, %v145
    %v147 = vlaneseq
    %v148 = vshrl.u32 %v147, 7
    %v149 = vsub.s32 1, %v148
    %v150 = vrot.slane %v54, %v149
    %v151 = vlaneseq
    %v152 = vshrl.u32 %v151, 7
    %v153 = vsub.s32 2, %v152
    %v154 = vrot.slane %v54, %v153
    %v155 = vlaneseq
    %v156 = vshrl.u32 %v155, 7
    %v157 = vsub.s32 3, %v156
    %v158 = vrot.slane %v54, %v157
    %v159 = vlaneseq
    %v160 = vshrl.u32 %v159, 7
    %v161 = vsub.s32 4, %v160
    %v162 = vrot.slane %v54, %v161
    %v163 = vlaneseq
    %v164 = vshrl.u32 %v163, 7
    %v165 = vsub.s32 5, %v164
    %v166 = vrot.slane %v54, %v165
    %v167 = vlaneseq
    %v168 = vshrl.u32 %v167, 7
    %v169 = vsub.s32 6, %v168
    %v170 = vrot.slane %v54, %v169
    %v171 = vlaneseq
    %v172 = vshrl.u32 %v171, 7
    %v173 = vsub.s32 7, %v172
    %v174 = vrot.slane %v54, %v173
    %v175 = vlaneseq
    %v176 = vshrl.u32 %v175, 7
    %v177 = vsub.s32 0, %v176
    %v178 = vrot.slane %v69, %v177
    %v179 = vlaneseq
    %v180 = vshrl.u32 %v179, 7
    %v181 = vsub.s32 1, %v180
    %v182 = vrot.slane %v69, %v181
    %v183 = vlaneseq
    %v184 = vshrl.u32 %v183, 7
    %v185 = vsub.s32 2, %v184
    %v186 = vrot.slane %v69, %v185
    %v187 = vlaneseq
    %v188 = vshrl.u32 %v187, 7
    %v189 = vsub.s32 3, %v188
    %v190 = vrot.slane %v69, %v189
    %v191 = vlaneseq
    %v192 = vshrl.u32 %v191, 7
    %v193 = vsub.s32 4, %v192
    %v194 = vrot.slane %v69, %v193
    %v195 = vlaneseq
    %v196 = vshrl.u32 %v195, 7
    %v197 = vsub.s32 5, %v196
    %v198 = vrot.slane %v69, %v197
    %v199 = vlaneseq
    %v200 = vshrl.u32 %v199, 7
    %v201 = vsub.s32 6, %v200
    %v202 = vrot.slane %v69, %v201
    %v203 = vlaneseq
    %v204 = vshrl.u32 %v203, 7
    %v205 = vsub.s32 7, %v204
    %v206 = vrot.slane %v69, %v205
    %v207 = vlaneseq
    %v208 = vshrl.u32 %v207, 7
    %v209 = vsub.s32 0, %v208
    %v210 = vrot.slane %v70, %v209
    %v211 = vlaneseq
    %v212 = vshrl.u32 %v211, 7
    %v213 = vsub.s32 1, %v212
    %v214 = vrot.slane %v70, %v213
    %v215 = vlaneseq
    %v216 = vshrl.u32 %v215, 7
    %v217 = vsub.s32 2, %v216
    %v218 = vrot.slane %v70, %v217
    %v219 = vlaneseq
    %v220 = vshrl.u32 %v219, 7
    %v221 = vsub.s32 3, %v220
    %v222 = vrot.slane %v70, %v221
    %v223 = vlaneseq
    %v224 = vshrl.u32 %v223, 7
    %v225 = vsub.s32 4, %v224
    %v226 = vrot.slane %v70, %v225
    %v227 = vlaneseq
    %v228 = vshrl.u32 %v227, 7
    %v229 = vsub.s32 5, %v228
    %v230 = vrot.slane %v70, %v229
    %v231 = vlaneseq
    %v232 = vshrl.u32 %v231, 7
    %v233 = vsub.s32 6, %v232
    %v234 = vrot.slane %v70, %v233
    %v235 = vlaneseq
    %v236 = vshrl.u32 %v235, 7
    %v237 = vsub.s32 7, %v236
    %v238 = vrot.slane %v70, %v237
    %v239 = vlaneseq
    %v240 = vshrl.u32 %v239, 7
    %v241 = vsub.s32 0, %v240
    %v242 = vrot.slane %v85, %v241
    %v243 = vlaneseq
    %v244 = vshrl.u32 %v243, 7
    %v245 = vsub.s32 1, %v244
    %v246 = vrot.slane %v85, %v245
    %v247 = vlaneseq
    %v248 = vshrl.u32 %v247, 7
    %v249 = vsub.s32 2, %v248
    %v250 = vrot.slane %v85, %v249
    %v251 = vlaneseq
    %v252 = vshrl.u32 %v251, 7
    %v253 = vsub.s32 3, %v252
    %v254 = vrot.slane %v85, %v253
    %v255 = vlaneseq
    %v256 = vshrl.u32 %v255, 7
    %v257 = vsub.s32 4, %v256
    %v258 = vrot.slane %v85, %v257
    %v259 = vlaneseq
    %v260 = vshrl.u32 %v259, 7
    %v261 = vsub.s32 5, %v260
    %v262 = vrot.slane %v85, %v261
    %v263 = vlaneseq
    %v264 = vshrl.u32 %v263, 7
    %v265 = vsub.s32 6, %v264
    %v266 = vrot.slane %v85, %v265
    %v267 = vlaneseq
    %v268 = vshrl.u32 %v267, 7
    %v269 = vsub.s32 7, %v268
    %v270 = vrot.slane %v85, %v269
    %v271 = vlaneseq
    %v272 = vshrl.u32 %v271, 7
    %v273 = vsub.s32 0, %v272
    %v274 = vrot.slane %v86, %v273
    %v275 = vlaneseq
    %v276 = vshrl.u32 %v275, 7
    %v277 = vsub.s32 1, %v276
    %v278 = vrot.slane %v86, %v277
    %v279 = vlaneseq
    %v280 = vshrl.u32 %v279, 7
    %v281 = vsub.s32 2, %v280
    %v282 = vrot.slane %v86, %v281
    %v283 = vlaneseq
    %v284 = vshrl.u32 %v283, 7
    %v285 = vsub.s32 3, %v284
    %v286 = vrot.slane %v86, %v285
    %v287 = vlaneseq
    %v288 = vshrl.u32 %v287, 7
    %v289 = vsub.s32 4, %v288
    %v290 = vrot.slane %v86, %v289
    %v291 = vlaneseq
    %v292 = vshrl.u32 %v291, 7
    %v293 = vsub.s32 5, %v292
    %v294 = vrot.slane %v86, %v293
    %v295 = vlaneseq
    %v296 = vshrl.u32 %v295, 7
    %v297 = vsub.s32 6, %v296
    %v298 = vrot.slane %v86, %v297
    %v299 = vlaneseq
    %v300 = vshrl.u32 %v299, 7
    %v301 = vsub.s32 7, %v300
    %v302 = vrot.slane %v86, %v301
    %v303 = vlaneseq
    %v304 = vshrl.u32 %v303, 7
    %v305 = vsub.s32 0, %v304
    %v306 = vrot.slane %v101, %v305
    %v307 = vlaneseq
    %v308 = vshrl.u32 %v307, 7
    %v309 = vsub.s32 1, %v308
    %v310 = vrot.slane %v101, %v309
    %v311 = vlaneseq
    %v312 = vshrl.u32 %v311, 7
    %v313 = vsub.s32 2, %v312
    %v314 = vrot.slane %v101, %v313
    %v315 = vlaneseq
    %v316 = vshrl.u32 %v315, 7
    %v317 = vsub.s32 3, %v316
    %v318 = vrot.slane %v101, %v317
    %v319 = vlaneseq
    %v320 = vshrl.u32 %v319, 7
    %v321 = vsub.s32 4, %v320
    %v322 = vrot.slane %v101, %v321
    %v323 = vlaneseq
    %v324 = vshrl.u32 %v323, 7
    %v325 = vsub.s32 5, %v324
    %v326 = vrot.slane %v101, %v325
    %v327 = vlaneseq
    %v328 = vshrl.u32 %v327, 7
    %v329 = vsub.s32 6, %v328
    %v330 = vrot.slane %v101, %v329
    %v331 = vlaneseq
    %v332 = vshrl.u32 %v331, 7
    %v333 = vsub.s32 7, %v332
    %v334 = vrot.slane %v101, %v333
    %v335 = vlaneseq
    %v336 = vshrl.u32 %v335, 7
    %v337 = vsub.s32 0, %v336
    %v338 = vrot.slane %v102, %v337
    %v339 = vlaneseq
    %v340 = vshrl.u32 %v339, 7
    %v341 = vsub.s32 1, %v340
    %v342 = vrot.slane %v102, %v341
    %v343 = vlaneseq
    %v344 = vshrl.u32 %v343, 7
    %v345 = vsub.s32 2, %v344
    %v346 = vrot.slane %v102, %v345
    %v347 = vlaneseq
    %v348 = vshrl.u32 %v347, 7
    %v349 = vsub.s32 3, %v348
    %v350 = vrot.slane %v102, %v349
    %v351 = vlaneseq
    %v352 = vshrl.u32 %v351, 7
    %v353 = vsub.s32 4, %v352
    %v354 = vrot.slane %v102, %v353
    %v355 = vlaneseq
    %v356 = vshrl.u32 %v355, 7
    %v357 = vsub.s32 5, %v356
    %v358 = vrot.slane %v102, %v357
    %v359 = vlaneseq
    %v360 = vshrl.u32 %v359, 7
    %v361 = vsub.s32 6, %v360
    %v362 = vrot.slane %v102, %v361
    %v363 = vlaneseq
    %v364 = vshrl.u32 %v363, 7
    %v365 = vsub.s32 7, %v364
    %v366 = vrot.slane %v102, %v365
    %vm431 = vcmask 1040384
    %v432 = vsel %vm431, %v114, 0.0
    %v433 = vsel %vm431, %v178, 0.0
    %v434 = vadd.f32 %v432, %v433
    %v435 = vsel %vm431, %v242, 0.0
    %v436 = vadd.f32 %v434, %v435
    %v437 = vsel %vm431, %v306, 0.0
    %v438 = vadd.f32 %v436, %v437
    %v439 = vsel %vm431, %v118, 0.0
    %v440 = vsel %vm431, %v182, 0.0
    %v441 = vadd.f32 %v439, %v440
    %v442 = vsel %vm431, %v246, 0.0
    %v443 = vadd.f32 %v441, %v442
    %v444 = vsel %vm431, %v310, 0.0
    %v445 = vadd.f32 %v443, %v444
    %v446 = vsel %vm431, %v122, 0.0
    %v447 = vsel %vm431, %v186, 0.0
    %v448 = vadd.f32 %v446, %v447
    %v449 = vsel %vm431, %v250, 0.0
    %v450 = vadd.f32 %v448, %v449
    %v451 = vsel %vm431, %v314, 0.0
    %v452 = vadd.f32 %v450, %v451
    %v453 = vsel %vm431, %v126, 0.0
    %v454 = vsel %vm431, %v190, 0.0
    %v455 = vadd.f32 %v453, %v454
    %v456 = vsel %vm431, %v254, 0.0
    %v457 = vadd.f32 %v455, %v456
    %v458 = vsel %vm431, %v318, 0.0
    %v459 = vadd.f32 %v457, %v458
    %v460 = vsel %vm431, %v130, 0.0
    %v461 = vsel %vm431, %v194, 0.0
    %v462 = vadd.f32 %v460, %v461
    %v463 = vsel %vm431, %v258, 0.0
    %v464 = vadd.f32 %v462, %v463
    %v465 = vsel %vm431, %v322, 0.0
    %v466 = vadd.f32 %v464, %v465
    %v467 = vsel %vm431, %v134, 0.0
    %v468 = vsel %vm431, %v198, 0.0
    %v469 = vadd.f32 %v467, %v468
    %v470 = vsel %vm431, %v262, 0.0
    %v471 = vadd.f32 %v469, %v470
    %v472 = vsel %vm431, %v326, 0.0
    %v473 = vadd.f32 %v471, %v472
    %v474 = vsel %vm431, %v138, 0.0
    %v475 = vsel %vm431, %v202, 0.0
    %v476 = vadd.f32 %v474, %v475
    %v477 = vsel %vm431, %v266, 0.0
    %v478 = vadd.f32 %v476, %v477
    %v479 = vsel %vm431, %v330, 0.0
    %v480 = vadd.f32 %v478, %v479
    %v481 = vsel %vm431, %v142, 0.0
    %v482 = vsel %vm431, %v206, 0.0
    %v483 = vadd.f32 %v481, %v482
    %v484 = vsel %vm431, %v270, 0.0
    %v485 = vadd.f32 %v483, %v484
    %v486 = vsel %vm431, %v334, 0.0
    %v487 = vadd.f32 %v485, %v486
    %v488 = vsel %vm431, %v146, 0.0
    %v489 = vsel %vm431, %v210, 0.0
    %v490 = vadd.f32 %v488, %v489
    %v491 = vsel %vm431, %v274, 0.0
    %v492 = vadd.f32 %v490, %v491
    %v493 = vsel %vm431, %v338, 0.0
    %v494 = vadd.f32 %v492, %v493
    %v495 = vsel %vm431, %v150, 0.0
    %v496 = vsel %vm431, %v214, 0.0
    %v497 = vadd.f32 %v495, %v496
    %v498 = vsel %vm431, %v278, 0.0
    %v499 = vadd.f32 %v497, %v498
    %v500 = vsel %vm431, %v342, 0.0
    %v501 = vadd.f32 %v499, %v500
    %v502 = vsel %vm431, %v154, 0.0
    %v503 = vsel %vm431, %v218, 0.0
    %v504 = vadd.f32 %v502, %v503
    %v505 = vsel %vm431, %v282, 0.0
    %v506 = vadd.f32 %v504, %v505
    %v507 = vsel %vm431, %v346, 0.0
    %v508 = vadd.f32 %v506, %v507
    %v509 = vsel %vm431, %v158, 0.0
    %v510 = vsel %vm431, %v222, 0.0
    %v511 = vadd.f32 %v509, %v510
    %v512 = vsel %vm431, %v286, 0.0
    %v513 = vadd.f32 %v511, %v512
    %v514 = vsel %vm431, %v350, 0.0
    %v515 = vadd.f32 %v513, %v514
    %v516 = vsel %vm431, %v162, 0.0
    %v517 = vsel %vm431, %v226, 0.0
    %v518 = vadd.f32 %v516, %v517
    %v519 = vsel %vm431, %v290, 0.0
    %v520 = vadd.f32 %v518, %v519
    %v521 = vsel %vm431, %v354, 0.0
    %v522 = vadd.f32 %v520, %v521
    %v523 = vsel %vm431, %v166, 0.0
    %v524 = vsel %vm431, %v230, 0.0
    %v525 = vadd.f32 %v523, %v524
    %v526 = vsel %vm431, %v294, 0.0
    %v527 = vadd.f32 %v525, %v526
    %v528 = vsel %vm431, %v358, 0.0
    %v529 = vadd.f32 %v527, %v528
    %v530 = vsel %vm431, %v170, 0.0
    %v531 = vsel %vm431, %v234, 0.0
    %v532 = vadd.f32 %v530, %v531
    %v533 = vsel %vm431, %v298, 0.0
    %v534 = vadd.f32 %v532, %v533
    %v535 = vsel %vm431, %v362, 0.0
    %v536 = vadd.f32 %v534, %v535
    %v537 = vsel %vm431, %v174, 0.0
    %v538 = vsel %vm431, %v238, 0.0
    %v539 = vadd.f32 %v537, %v538
    %v540 = vsel %vm431, %v302, 0.0
    %v541 = vadd.f32 %v539, %v540
    %v542 = vsel %vm431, %v366, 0.0
    %v543 = vadd.f32 %v541, %v542
    %v544 = vrcp.pop 4.0
    %v545 = vmul.f32 %v438, %v544
    %v546 = vmul.f32 %v445, %v544
    %v547 = vmul.f32 %v452, %v544
    %v548 = vmul.f32 %v459, %v544
    %v549 = vmul.f32 %v466, %v544
    %v550 = vmul.f32 %v473, %v544
    %v551 = vmul.f32 %v480, %v544
    %v552 = vmul.f32 %v487, %v544
    %v553 = vmul.f32 %v494, %v544
    %v554 = vmul.f32 %v501, %v544
    %v555 = vmul.f32 %v508, %v544
    %v556 = vmul.f32 %v515, %v544
    %v557 = vmul.f32 %v522, %v544
    %v558 = vmul.f32 %v529, %v544
    %v559 = vmul.f32 %v536, %v544
    %v560 = vmul.f32 %v543, %v544
    %v577 = vcombine.low %v545, %v546
    %v578 = vcombine.low %v547, %v548
    %v579 = vcombine.low %v549, %v550
    %v580 = vcombine.low %v551, %v552
    %v582 = vunpack.c.l.s4 1966171168
    %v583 = vunpack.c.0.s8 %v582
    %v584 = vlaneseq
    %v585 = vshrl.u32 %v584, 7
    %v586 = vsub.s32 %v583, %v585
    %v587 = vrot.slane %v577, %v586
    %v589 = vunpack.c.l.s4 1966171168
    %v590 = vunpack.c.0.s8 %v589
    %v591 = vlaneseq
    %v592 = vshrl.u32 %v591, 7
    %v593 = vsub.s32 %v590, %v592
    %v594 = vrot.slane %v578, %v593
    %v596 = vunpack.c.l.s4 1966171168
    %v597 = vunpack.c.0.s8 %v596
    %v598 = vlaneseq
    %v599 = vshrl.u32 %v598, 7
    %v600 = vsub.s32 %v597, %v599
    %v601 = vrot.slane %v579, %v600
    %v603 = vunpack.c.l.s4 1966171168
    %v604 = vunpack.c.0.s8 %v603
    %v605 = vlaneseq
    %v606 = vshrl.u32 %v605, 7
    %v607 = vsub.s32 %v604, %v606
    %v608 = vrot.slane %v580, %v607
    %v609 = vcombine.low %v587, %v594
    %v610 = vcombine.low %v601, %v608
    %v612 = vunpack.c.l.s4 1966171168
    %v613 = vunpack.c.0.s8 %v612
    %v614 = vlaneseq
    %v615 = vshrl.u32 %v614, 7
    %v616 = vsub.s32 %v613, %v615
    %v617 = vrot.slane %v609, %v616
    %v619 = vunpack.c.l.s4 1966171168
    %v620 = vunpack.c.0.s8 %v619
    %v621 = vlaneseq
    %v622 = vshrl.u32 %v621, 7
    %v623 = vsub.s32 %v620, %v622
    %v624 = vrot.slane %v610, %v623
    %v625 = vcombine.low %v617, %v624
    %v626 = vcombine.low %v553, %v554
    %v627 = vcombine.low %v555, %v556
    %v628 = vcombine.low %v557, %v558
    %v629 = vcombine.low %v559, %v560
    %v631 = vunpack.c.l.s4 1966171168
    %v632 = vunpack.c.0.s8 %v631
    %v633 = vlaneseq
    %v634 = vshrl.u32 %v633, 7
    %v635 = vsub.s32 %v632, %v634
    %v636 = vrot.slane %v626, %v635
    %v638 = vunpack.c.l.s4 1966171168
    %v639 = vunpack.c.0.s8 %v638
    %v640 = vlaneseq
    %v641 = vshrl.u32 %v640, 7
    %v642 = vsub.s32 %v639, %v641
    %v643 = vrot.slane %v627, %v642
    %v645 = vunpack.c.l.s4 1966171168
    %v646 = vunpack.c.0.s8 %v645
    %v647 = vlaneseq
    %v648 = vshrl.u32 %v647, 7
    %v649 = vsub.s32 %v646, %v648
    %v650 = vrot.slane %v628, %v649
    %v652 = vunpack.c.l.s4 1966171168
    %v653 = vunpack.c.0.s8 %v652
    %v654 = vlaneseq
    %v655 = vshrl.u32 %v654, 7
    %v656 = vsub.s32 %v653, %v655
    %v657 = vrot.slane %v629, %v656
    %v658 = vcombine.low %v636, %v643
    %v659 = vcombine.low %v650, %v657
    %v661 = vunpack.c.l.s4 1966171168
    %v662 = vunpack.c.0.s8 %v661
    %v663 = vlaneseq
    %v664 = vshrl.u32 %v663, 7
    %v665 = vsub.s32 %v662, %v664
    %v666 = vrot.slane %v658, %v665
    %v668 = vunpack.c.l.s4 1966171168
    %v669 = vunpack.c.0.s8 %v668
    %v670 = vlaneseq
    %v671 = vshrl.u32 %v670, 7
    %v672 = vsub.s32 %v669, %v671
    %v673 = vrot.slane %v659, %v672
    %v674 = vcombine.low %v666, %v673
    %v677 = vsub.f32 %v53, %v625
    %v678 = vsub.f32 %v54, %v674
    %v679 = vsub.f32 %v69, %v625
    %v680 = vsub.f32 %v70, %v674
    %v681 = vsub.f32 %v85, %v625
    %v682 = vsub.f32 %v86, %v674
    %v683 = vsub.f32 %v101, %v625
    %v684 = vsub.f32 %v102, %v674
    %v685 = vmul.f32 %v677, %v677
    %v686 = vmul.f32 %v678, %v678
    %v687 = vmul.f32 %v679, %v679
    %v688 = vmul.f32 %v680, %v680
    %v689 = vmul.f32 %v681, %v681
    %v690 = vmul.f32 %v682, %v682
    %v691 = vmul.f32 %v683, %v683
    %v692 = vmul.f32 %v684, %v684
    %v701 = vlaneseq
    %v702 = vshrl.u32 %v701, 7
    %v703 = vsub.s32 0, %v702
    %v704 = vrot.slane %v685, %v703
    %v705 = vlaneseq
    %v706 = vshrl.u32 %v705, 7
    %v707 = vsub.s32 1, %v706
    %v708 = vrot.slane %v685, %v707
    %v709 = vlaneseq
    %v710 = vshrl.u32 %v709, 7
    %v711 = vsub.s32 2, %v710
    %v712 = vrot.slane %v685, %v711
    %v713 = vlaneseq
    %v714 = vshrl.u32 %v713, 7
    %v715 = vsub.s32 3, %v714
    %v716 = vrot.slane %v685, %v715
    %v717 = vlaneseq
    %v718 = vshrl.u32 %v717, 7
    %v719 = vsub.s32 4, %v718
    %v720 = vrot.slane %v685, %v719
    %v721 = vlaneseq
    %v722 = vshrl.u32 %v721, 7
    %v723 = vsub.s32 5, %v722
    %v724 = vrot.slane %v685, %v723
    %v725 = vlaneseq
    %v726 = vshrl.u32 %v725, 7
    %v727 = vsub.s32 6, %v726
    %v728 = vrot.slane %v685, %v727
    %v729 = vlaneseq
    %v730 = vshrl.u32 %v729, 7
    %v731 = vsub.s32 7, %v730
    %v732 = vrot.slane %v685, %v731
    %v733 = vlaneseq
    %v734 = vshrl.u32 %v733, 7
    %v735 = vsub.s32 0, %v734
    %v736 = vrot.slane %v686, %v735
    %v737 = vlaneseq
    %v738 = vshrl.u32 %v737, 7
    %v739 = vsub.s32 1, %v738
    %v740 = vrot.slane %v686, %v739
    %v741 = vlaneseq
    %v742 = vshrl.u32 %v741, 7
    %v743 = vsub.s32 2, %v742
    %v744 = vrot.slane %v686, %v743
    %v745 = vlaneseq
    %v746 = vshrl.u32 %v745, 7
    %v747 = vsub.s32 3, %v746
    %v748 = vrot.slane %v686, %v747
    %v749 = vlaneseq
    %v750 = vshrl.u32 %v749, 7
    %v751 = vsub.s32 4, %v750
    %v752 = vrot.slane %v686, %v751
    %v753 = vlaneseq
    %v754 = vshrl.u32 %v753, 7
    %v755 = vsub.s32 5, %v754
    %v756 = vrot.slane %v686, %v755
    %v757 = vlaneseq
    %v758 = vshrl.u32 %v757, 7
    %v759 = vsub.s32 6, %v758
    %v760 = vrot.slane %v686, %v759
    %v761 = vlaneseq
    %v762 = vshrl.u32 %v761, 7
    %v763 = vsub.s32 7, %v762
    %v764 = vrot.slane %v686, %v763
    %v765 = vlaneseq
    %v766 = vshrl.u32 %v765, 7
    %v767 = vsub.s32 0, %v766
    %v768 = vrot.slane %v687, %v767
    %v769 = vlaneseq
    %v770 = vshrl.u32 %v769, 7
    %v771 = vsub.s32 1, %v770
    %v772 = vrot.slane %v687, %v771
    %v773 = vlaneseq
    %v774 = vshrl.u32 %v773, 7
    %v775 = vsub.s32 2, %v774
    %v776 = vrot.slane %v687, %v775
    %v777 = vlaneseq
    %v778 = vshrl.u32 %v777, 7
    %v779 = vsub.s32 3, %v778
    %v780 = vrot.slane %v687, %v779
    %v781 = vlaneseq
    %v782 = vshrl.u32 %v781, 7
    %v783 = vsub.s32 4, %v782
    %v784 = vrot.slane %v687, %v783
    %v785 = vlaneseq
    %v786 = vshrl.u32 %v785, 7
    %v787 = vsub.s32 5, %v786
    %v788 = vrot.slane %v687, %v787
    %v789 = vlaneseq
    %v790 = vshrl.u32 %v789, 7
    %v791 = vsub.s32 6, %v790
    %v792 = vrot.slane %v687, %v791
    %v793 = vlaneseq
    %v794 = vshrl.u32 %v793, 7
    %v795 = vsub.s32 7, %v794
    %v796 = vrot.slane %v687, %v795
    %v797 = vlaneseq
    %v798 = vshrl.u32 %v797, 7
    %v799 = vsub.s32 0, %v798
    %v800 = vrot.slane %v688, %v799
    %v801 = vlaneseq
    %v802 = vshrl.u32 %v801, 7
    %v803 = vsub.s32 1, %v802
    %v804 = vrot.slane %v688, %v803
    %v805 = vlaneseq
    %v806 = vshrl.u32 %v805, 7
    %v807 = vsub.s32 2, %v806
    %v808 = vrot.slane %v688, %v807
    %v809 = vlaneseq
    %v810 = vshrl.u32 %v809, 7
    %v811 = vsub.s32 3, %v810
    %v812 = vrot.slane %v688, %v811
    %v813 = vlaneseq
    %v814 = vshrl.u32 %v813, 7
    %v815 = vsub.s32 4, %v814
    %v816 = vrot.slane %v688, %v815
    %v817 = vlaneseq
    %v818 = vshrl.u32 %v817, 7
    %v819 = vsub.s32 5, %v818
    %v820 = vrot.slane %v688, %v819
    %v821 = vlaneseq
    %v822 = vshrl.u32 %v821, 7
    %v823 = vsub.s32 6, %v822
    %v824 = vrot.slane %v688, %v823
    %v825 = vlaneseq
    %v826 = vshrl.u32 %v825, 7
    %v827 = vsub.s32 7, %v826
    %v828 = vrot.slane %v688, %v827
    %v829 = vlaneseq
    %v830 = vshrl.u32 %v829, 7
    %v831 = vsub.s32 0, %v830
    %v832 = vrot.slane %v689, %v831
    %v833 = vlaneseq
    %v834 = vshrl.u32 %v833, 7
    %v835 = vsub.s32 1, %v834
    %v836 = vrot.slane %v689, %v835
    %v837 = vlaneseq
    %v838 = vshrl.u32 %v837, 7
    %v839 = vsub.s32 2, %v838
    %v840 = vrot.slane %v689, %v839
    %v841 = vlaneseq
    %v842 = vshrl.u32 %v841, 7
    %v843 = vsub.s32 3, %v842
    %v844 = vrot.slane %v689, %v843
    %v845 = vlaneseq
    %v846 = vshrl.u32 %v845, 7
    %v847 = vsub.s32 4, %v846
    %v848 = vrot.slane %v689, %v847
    %v849 = vlaneseq
    %v850 = vshrl.u32 %v849, 7
    %v851 = vsub.s32 5, %v850
    %v852 = vrot.slane %v689, %v851
    %v853 = vlaneseq
    %v854 = vshrl.u32 %v853, 7
    %v855 = vsub.s32 6, %v854
    %v856 = vrot.slane %v689, %v855
    %v857 = vlaneseq
    %v858 = vshrl.u32 %v857, 7
    %v859 = vsub.s32 7, %v858
    %v860 = vrot.slane %v689, %v859
    %v861 = vlaneseq
    %v862 = vshrl.u32 %v861, 7
    %v863 = vsub.s32 0, %v862
    %v864 = vrot.slane %v690, %v863
    %v865 = vlaneseq
    %v866 = vshrl.u32 %v865, 7
    %v867 = vsub.s32 1, %v866
    %v868 = vrot.slane %v690, %v867
    %v869 = vlaneseq
    %v870 = vshrl.u32 %v869, 7
    %v871 = vsub.s32 2, %v870
    %v872 = vrot.slane %v690, %v871
    %v873 = vlaneseq
    %v874 = vshrl.u32 %v873, 7
    %v875 = vsub.s32 3, %v874
    %v876 = vrot.slane %v690, %v875
    %v877 = vlaneseq
    %v878 = vshrl.u32 %v877, 7
    %v879 = vsub.s32 4, %v878
    %v880 = vrot.slane %v690, %v879
    %v881 = vlaneseq
    %v882 = vshrl.u32 %v881, 7
    %v883 = vsub.s32 5, %v882
    %v884 = vrot.slane %v690, %v883
    %v885 = vlaneseq
    %v886 = vshrl.u32 %v885, 7
    %v887 = vsub.s32 6, %v886
    %v888 = vrot.slane %v690, %v887
    %v889 = vlaneseq
    %v890 = vshrl.u32 %v889, 7
    %v891 = vsub.s32 7, %v890
    %v892 = vrot.slane %v690, %v891
    %v893 = vlaneseq
    %v894 = vshrl.u32 %v893, 7
    %v895 = vsub.s32 0, %v894
    %v896 = vrot.slane %v691, %v895
    %v897 = vlaneseq
    %v898 = vshrl.u32 %v897, 7
    %v899 = vsub.s32 1, %v898
    %v900 = vrot.slane %v691, %v899
    %v901 = vlaneseq
    %v902 = vshrl.u32 %v901, 7
    %v903 = vsub.s32 2, %v902
    %v904 = vrot.slane %v691, %v903
    %v905 = vlaneseq
    %v906 = vshrl.u32 %v905, 7
    %v907 = vsub.s32 3, %v906
    %v908 = vrot.slane %v691, %v907
    %v909 = vlaneseq
    %v910 = vshrl.u32 %v909, 7
    %v911 = vsub.s32 4, %v910
    %v912 = vrot.slane %v691, %v911
    %v913 = vlaneseq
    %v914 = vshrl.u32 %v913, 7
    %v915 = vsub.s32 5, %v914
    %v916 = vrot.slane %v691, %v915
    %v917 = vlaneseq
    %v918 = vshrl.u32 %v917, 7
    %v919 = vsub.s32 6, %v918
    %v920 = vrot.slane %v691, %v919
    %v921 = vlaneseq
    %v922 = vshrl.u32 %v921, 7
    %v923 = vsub.s32 7, %v922
    %v924 = vrot.slane %v691, %v923
    %v925 = vlaneseq
    %v926 = vshrl.u32 %v925, 7
    %v927 = vsub.s32 0, %v926
    %v928 = vrot.slane %v692, %v927
    %v929 = vlaneseq
    %v930 = vshrl.u32 %v929, 7
    %v931 = vsub.s32 1, %v930
    %v932 = vrot.slane %v692, %v931
    %v933 = vlaneseq
    %v934 = vshrl.u32 %v933, 7
    %v935 = vsub.s32 2, %v934
    %v936 = vrot.slane %v692, %v935
    %v937 = vlaneseq
    %v938 = vshrl.u32 %v937, 7
    %v939 = vsub.s32 3, %v938
    %v940 = vrot.slane %v692, %v939
    %v941 = vlaneseq
    %v942 = vshrl.u32 %v941, 7
    %v943 = vsub.s32 4, %v942
    %v944 = vrot.slane %v692, %v943
    %v945 = vlaneseq
    %v946 = vshrl.u32 %v945, 7
    %v947 = vsub.s32 5, %v946
    %v948 = vrot.slane %v692, %v947
    %v949 = vlaneseq
    %v950 = vshrl.u32 %v949, 7
    %v951 = vsub.s32 6, %v950
    %v952 = vrot.slane %v692, %v951
    %v953 = vlaneseq
    %v954 = vshrl.u32 %v953, 7
    %v955 = vsub.s32 7, %v954
    %v956 = vrot.slane %v692, %v955
    %v1021 = vsel %vm431, %v704, 0.0
    %v1022 = vsel %vm431, %v768, 0.0
    %v1023 = vadd.f32 %v1021, %v1022
    %v1024 = vsel %vm431, %v832, 0.0
    %v1025 = vadd.f32 %v1023, %v1024
    %v1026 = vsel %vm431, %v896, 0.0
    %v1027 = vadd.f32 %v1025, %v1026
    %v1028 = vsel %vm431, %v708, 0.0
    %v1029 = vsel %vm431, %v772, 0.0
    %v1030 = vadd.f32 %v1028, %v1029
    %v1031 = vsel %vm431, %v836, 0.0
    %v1032 = vadd.f32 %v1030, %v1031
    %v1033 = vsel %vm431, %v900, 0.0
    %v1034 = vadd.f32 %v1032, %v1033
    %v1035 = vsel %vm431, %v712, 0.0
    %v1036 = vsel %vm431, %v776, 0.0
    %v1037 = vadd.f32 %v1035, %v1036
    %v1038 = vsel %vm431, %v840, 0.0
    %v1039 = vadd.f32 %v1037, %v1038
    %v1040 = vsel %vm431, %v904, 0.0
    %v1041 = vadd.f32 %v1039, %v1040
    %v1042 = vsel %vm431, %v716, 0.0
    %v1043 = vsel %vm431, %v780, 0.0
    %v1044 = vadd.f32 %v1042, %v1043
    %v1045 = vsel %vm431, %v844, 0.0
    %v1046 = vadd.f32 %v1044, %v1045
    %v1047 = vsel %vm431, %v908, 0.0
    %v1048 = vadd.f32 %v1046, %v1047
    %v1049 = vsel %vm431, %v720, 0.0
    %v1050 = vsel %vm431, %v784, 0.0
    %v1051 = vadd.f32 %v1049, %v1050
    %v1052 = vsel %vm431, %v848, 0.0
    %v1053 = vadd.f32 %v1051, %v1052
    %v1054 = vsel %vm431, %v912, 0.0
    %v1055 = vadd.f32 %v1053, %v1054
    %v1056 = vsel %vm431, %v724, 0.0
    %v1057 = vsel %vm431, %v788, 0.0
    %v1058 = vadd.f32 %v1056, %v1057
    %v1059 = vsel %vm431, %v852, 0.0
    %v1060 = vadd.f32 %v1058, %v1059
    %v1061 = vsel %vm431, %v916, 0.0
    %v1062 = vadd.f32 %v1060, %v1061
    %v1063 = vsel %vm431, %v728, 0.0
    %v1064 = vsel %vm431, %v792, 0.0
    %v1065 = vadd.f32 %v1063, %v1064
    %v1066 = vsel %vm431, %v856, 0.0
    %v1067 = vadd.f32 %v1065, %v1066
    %v1068 = vsel %vm431, %v920, 0.0
    %v1069 = vadd.f32 %v1067, %v1068
    %v1070 = vsel %vm431, %v732, 0.0
    %v1071 = vsel %vm431, %v796, 0.0
    %v1072 = vadd.f32 %v1070, %v1071
    %v1073 = vsel %vm431, %v860, 0.0
    %v1074 = vadd.f32 %v1072, %v1073
    %v1075 = vsel %vm431, %v924, 0.0
    %v1076 = vadd.f32 %v1074, %v1075
    %v1077 = vsel %vm431, %v736, 0.0
    %v1078 = vsel %vm431, %v800, 0.0
    %v1079 = vadd.f32 %v1077, %v1078
    %v1080 = vsel %vm431, %v864, 0.0
    %v1081 = vadd.f32 %v1079, %v1080
    %v1082 = vsel %vm431, %v928, 0.0
    %v1083 = vadd.f32 %v1081, %v1082
    %v1084 = vsel %vm431, %v740, 0.0
    %v1085 = vsel %vm431, %v804, 0.0
    %v1086 = vadd.f32 %v1084, %v1085
    %v1087 = vsel %vm431, %v868, 0.0
    %v1088 = vadd.f32 %v1086, %v1087
    %v1089 = vsel %vm431, %v932, 0.0
    %v1090 = vadd.f32 %v1088, %v1089
    %v1091 = vsel %vm431, %v744, 0.0
    %v1092 = vsel %vm431, %v808, 0.0
    %v1093 = vadd.f32 %v1091, %v1092
    %v1094 = vsel %vm431, %v872, 0.0
    %v1095 = vadd.f32 %v1093, %v1094
    %v1096 = vsel %vm431, %v936, 0.0
    %v1097 = vadd.f32 %v1095, %v1096
    %v1098 = vsel %vm431, %v748, 0.0
    %v1099 = vsel %vm431, %v812, 0.0
    %v1100 = vadd.f32 %v1098, %v1099
    %v1101 = vsel %vm431, %v876, 0.0
    %v1102 = vadd.f32 %v1100, %v1101
    %v1103 = vsel %vm431, %v940, 0.0
    %v1104 = vadd.f32 %v1102, %v1103
    %v1105 = vsel %vm431, %v752, 0.0
    %v1106 = vsel %vm431, %v816, 0.0
    %v1107 = vadd.f32 %v1105, %v1106
    %v1108 = vsel %vm431, %v880, 0.0
    %v1109 = vadd.f32 %v1107, %v1108
    %v1110 = vsel %vm431, %v944, 0.0
    %v1111 = vadd.f32 %v1109, %v1110
    %v1112 = vsel %vm431, %v756, 0.0
    %v1113 = vsel %vm431, %v820, 0.0
    %v1114 = vadd.f32 %v1112, %v1113
    %v1115 = vsel %vm431, %v884, 0.0
    %v1116 = vadd.f32 %v1114, %v1115
    %v1117 = vsel %vm431, %v948, 0.0
    %v1118 = vadd.f32 %v1116, %v1117
    %v1119 = vsel %vm431, %v760, 0.0
    %v1120 = vsel %vm431, %v824, 0.0
    %v1121 = vadd.f32 %v1119, %v1120
    %v1122 = vsel %vm431, %v888, 0.0
    %v1123 = vadd.f32 %v1121, %v1122
    %v1124 = vsel %vm431, %v952, 0.0
    %v1125 = vadd.f32 %v1123, %v1124
    %v1126 = vsel %vm431, %v764, 0.0
    %v1127 = vsel %vm431, %v828, 0.0
    %v1128 = vadd.f32 %v1126, %v1127
    %v1129 = vsel %vm431, %v892, 0.0
    %v1130 = vadd.f32 %v1128, %v1129
    %v1131 = vsel %vm431, %v956, 0.0
    %v1132 = vadd.f32 %v1130, %v1131
    %v1133 = vmul.f32 %v1027, %v544
    %v1134 = vmul.f32 %v1034, %v544
    %v1135 = vmul.f32 %v1041, %v544
    %v1136 = vmul.f32 %v1048, %v544
    %v1137 = vmul.f32 %v1055, %v544
    %v1138 = vmul.f32 %v1062, %v544
    %v1139 = vmul.f32 %v1069, %v544
    %v1140 = vmul.f32 %v1076, %v544
    %v1141 = vmul.f32 %v1083, %v544
    %v1142 = vmul.f32 %v1090, %v544
    %v1143 = vmul.f32 %v1097, %v544
    %v1144 = vmul.f32 %v1104, %v544
    %v1145 = vmul.f32 %v1111, %v544
    %v1146 = vmul.f32 %v1118, %v544
    %v1147 = vmul.f32 %v1125, %v544
    %v1148 = vmul.f32 %v1132, %v544
    %v1149 = vadd.f32 %v1133, 1e-08
    %v1150 = vadd.f32 %v1134, 1e-08
    %v1151 = vadd.f32 %v1135, 1e-08
    %v1152 = vadd.f32 %v1136, 1e-08
    %v1153 = vadd.f32 %v1137, 1e-08
    %v1154 = vadd.f32 %v1138, 1e-08
    %v1155 = vadd.f32 %v1139, 1e-08
    %v1156 = vadd.f32 %v1140, 1e-08
    %v1157 = vadd.f32 %v1141, 1e-08
    %v1158 = vadd.f32 %v1142, 1e-08
    %v1159 = vadd.f32 %v1143, 1e-08
    %v1160 = vadd.f32 %v1144, 1e-08
    %v1161 = vadd.f32 %v1145, 1e-08
    %v1162 = vadd.f32 %v1146, 1e-08
    %v1163 = vadd.f32 %v1147, 1e-08
    %v1164 = vadd.f32 %v1148, 1e-08
    %v1165 = vrsqrt.pop %v1149
    %v1166 = vmul.f32 %v1149, %v1165
    %vm1167 = vcmp.eq.f32.partialorder %v1149, inf
    %v1168 = vsel %vm1167, %v1149, %v1166
    %vm1169 = vcmp.eq.f32.partialorder %v1149, 0.0
    %v1170 = vand.u32 %v1149, 2147483648
    %v1171 = vsel %vm1169, %v1170, %v1168
    %v1172 = vrsqrt.pop %v1150
    %v1173 = vmul.f32 %v1150, %v1172
    %vm1174 = vcmp.eq.f32.partialorder %v1150, inf
    %v1175 = vsel %vm1174, %v1150, %v1173
    %vm1176 = vcmp.eq.f32.partialorder %v1150, 0.0
    %v1177 = vand.u32 %v1150, 2147483648
    %v1178 = vsel %vm1176, %v1177, %v1175
    %v1179 = vrsqrt.pop %v1151
    %v1180 = vmul.f32 %v1151, %v1179
    %vm1181 = vcmp.eq.f32.partialorder %v1151, inf
    %v1182 = vsel %vm1181, %v1151, %v1180
    %vm1183 = vcmp.eq.f32.partialorder %v1151, 0.0
    %v1184 = vand.u32 %v1151, 2147483648
    %v1185 = vsel %vm1183, %v1184, %v1182
    %v1186 = vrsqrt.pop %v1152
    %v1187 = vmul.f32 %v1152, %v1186
    %vm1188 = vcmp.eq.f32.partialorder %v1152, inf
    %v1189 = vsel %vm1188, %v1152, %v1187
    %vm1190 = vcmp.eq.f32.partialorder %v1152, 0.0
    %v1191 = vand.u32 %v1152, 2147483648
    %v1192 = vsel %vm1190, %v1191, %v1189
    %v1193 = vrsqrt.pop %v1153
    %v1194 = vmul.f32 %v1153, %v1193
    %vm1195 = vcmp.eq.f32.partialorder %v1153, inf
    %v1196 = vsel %vm1195, %v1153, %v1194
    %vm1197 = vcmp.eq.f32.partialorder %v1153, 0.0
    %v1198 = vand.u32 %v1153, 2147483648
    %v1199 = vsel %vm1197, %v1198, %v1196
    %v1200 = vrsqrt.pop %v1154
    %v1201 = vmul.f32 %v1154, %v1200
    %vm1202 = vcmp.eq.f32.partialorder %v1154, inf
    %v1203 = vsel %vm1202, %v1154, %v1201
    %vm1204 = vcmp.eq.f32.partialorder %v1154, 0.0
    %v1205 = vand.u32 %v1154, 2147483648
    %v1206 = vsel %vm1204, %v1205, %v1203
    %v1207 = vrsqrt.pop %v1155
    %v1208 = vmul.f32 %v1155, %v1207
    %vm1209 = vcmp.eq.f32.partialorder %v1155, inf
    %v1210 = vsel %vm1209, %v1155, %v1208
    %vm1211 = vcmp.eq.f32.partialorder %v1155, 0.0
    %v1212 = vand.u32 %v1155, 2147483648
    %v1213 = vsel %vm1211, %v1212, %v1210
    %v1214 = vrsqrt.pop %v1156
    %v1215 = vmul.f32 %v1156, %v1214
    %vm1216 = vcmp.eq.f32.partialorder %v1156, inf
    %v1217 = vsel %vm1216, %v1156, %v1215
    %vm1218 = vcmp.eq.f32.partialorder %v1156, 0.0
    %v1219 = vand.u32 %v1156, 2147483648
    %v1220 = vsel %vm1218, %v1219, %v1217
    %v1221 = vrsqrt.pop %v1157
    %v1222 = vmul.f32 %v1157, %v1221
    %vm1223 = vcmp.eq.f32.partialorder %v1157, inf
    %v1224 = vsel %vm1223, %v1157, %v1222
    %vm1225 = vcmp.eq.f32.partialorder %v1157, 0.0
    %v1226 = vand.u32 %v1157, 2147483648
    %v1227 = vsel %vm1225, %v1226, %v1224
    %v1228 = vrsqrt.pop %v1158
    %v1229 = vmul.f32 %v1158, %v1228
    %vm1230 = vcmp.eq.f32.partialorder %v1158, inf
    %v1231 = vsel %vm1230, %v1158, %v1229
    %vm1232 = vcmp.eq.f32.partialorder %v1158, 0.0
    %v1233 = vand.u32 %v1158, 2147483648
    %v1234 = vsel %vm1232, %v1233, %v1231
    %v1235 = vrsqrt.pop %v1159
    %v1236 = vmul.f32 %v1159, %v1235
    %vm1237 = vcmp.eq.f32.partialorder %v1159, inf
    %v1238 = vsel %vm1237, %v1159, %v1236
    %vm1239 = vcmp.eq.f32.partialorder %v1159, 0.0
    %v1240 = vand.u32 %v1159, 2147483648
    %v1241 = vsel %vm1239, %v1240, %v1238
    %v1242 = vrsqrt.pop %v1160
    %v1243 = vmul.f32 %v1160, %v1242
    %vm1244 = vcmp.eq.f32.partialorder %v1160, inf
    %v1245 = vsel %vm1244, %v1160, %v1243
    %vm1246 = vcmp.eq.f32.partialorder %v1160, 0.0
    %v1247 = vand.u32 %v1160, 2147483648
    %v1248 = vsel %vm1246, %v1247, %v1245
    %v1249 = vrsqrt.pop %v1161
    %v1250 = vmul.f32 %v1161, %v1249
    %vm1251 = vcmp.eq.f32.partialorder %v1161, inf
    %v1252 = vsel %vm1251, %v1161, %v1250
    %vm1253 = vcmp.eq.f32.partialorder %v1161, 0.0
    %v1254 = vand.u32 %v1161, 2147483648
    %v1255 = vsel %vm1253, %v1254, %v1252
    %v1256 = vrsqrt.pop %v1162
    %v1257 = vmul.f32 %v1162, %v1256
    %vm1258 = vcmp.eq.f32.partialorder %v1162, inf
    %v1259 = vsel %vm1258, %v1162, %v1257
    %vm1260 = vcmp.eq.f32.partialorder %v1162, 0.0
    %v1261 = vand.u32 %v1162, 2147483648
    %v1262 = vsel %vm1260, %v1261, %v1259
    %v1263 = vrsqrt.pop %v1163
    %v1264 = vmul.f32 %v1163, %v1263
    %vm1265 = vcmp.eq.f32.partialorder %v1163, inf
    %v1266 = vsel %vm1265, %v1163, %v1264
    %vm1267 = vcmp.eq.f32.partialorder %v1163, 0.0
    %v1268 = vand.u32 %v1163, 2147483648
    %v1269 = vsel %vm1267, %v1268, %v1266
    %v1270 = vrsqrt.pop %v1164
    %v1271 = vmul.f32 %v1164, %v1270
    %vm1272 = vcmp.eq.f32.partialorder %v1164, inf
    %v1273 = vsel %vm1272, %v1164, %v1271
    %vm1274 = vcmp.eq.f32.partialorder %v1164, 0.0
    %v1275 = vand.u32 %v1164, 2147483648
    %v1276 = vsel %vm1274, %v1275, %v1273
    %v1277 = vsel %vm431, %v1171, 0.0
    %v1278 = vsel %vm431, %v1178, 0.0
    %v1279 = vadd.f32 %v1277, %v1278
    %v1280 = vsel %vm431, %v1185, 0.0
    %v1281 = vadd.f32 %v1279, %v1280
    %v1282 = vsel %vm431, %v1192, 0.0
    %v1283 = vadd.f32 %v1281, %v1282
    %v1284 = vsel %vm431, %v1199, 0.0
    %v1285 = vadd.f32 %v1283, %v1284
    %v1286 = vsel %vm431, %v1206, 0.0
    %v1287 = vadd.f32 %v1285, %v1286
    %v1288 = vsel %vm431, %v1213, 0.0
    %v1289 = vadd.f32 %v1287, %v1288
    %v1290 = vsel %vm431, %v1220, 0.0
    %v1291 = vadd.f32 %v1289, %v1290
    %1292 = vadd.xlane.f32.xlu0 %v1291
    %v1293 = vpop.xlane.xlu0 %1292
    %v1294 = vsel %vm431, %v1227, 0.0
    %v1295 = vsel %vm431, %v1234, 0.0
    %v1296 = vadd.f32 %v1294, %v1295
    %v1297 = vsel %vm431, %v1241, 0.0
    %v1298 = vadd.f32 %v1296, %v1297
    %v1299 = vsel %vm431, %v1248, 0.0
    %v1300 = vadd.f32 %v1298, %v1299
    %v1301 = vsel %vm431, %v1255, 0.0
    %v1302 = vadd.f32 %v1300, %v1301
    %v1303 = vsel %vm431, %v1262, 0.0
    %v1304 = vadd.f32 %v1302, %v1303
    %v1305 = vsel %vm431, %v1269, 0.0
    %v1306 = vadd.f32 %v1304, %v1305
    %v1307 = vsel %vm431, %v1276, 0.0
    %v1308 = vadd.f32 %v1306, %v1307
    %1309 = vadd.xlane.f32.xlu0 %v1308
    %v1310 = vpop.xlane.xlu0 %1309
    %v1311 = vrcp.pop 1024.0
    %v1312 = vmul.f32 %v1293, %v1311
    %v1313 = vmul.f32 %v1310, %v1311
    %1314 = vst [vmem:[#allocation5] sm:$0xff] %v23
    %1315 = vst [vmem:[#allocation5 + $0x8] sm:$0xff] %v24
    %1316 = vst [vmem:[#allocation5 + $0x14] sm:$0xff] %v25
    %1317 = vst [vmem:[#allocation5 + $0x1c] sm:$0xff] %v26
    %1318 = vst [vmem:[#allocation5 + $0x28] sm:$0xff] %v27
    %1319 = vst [vmem:[#allocation5 + $0x30] sm:$0xff] %v28
    %1320 = vst [vmem:[#allocation5 + $0x3c] sm:$0xff] %v29
    %1321 = vst [vmem:[#allocation5 + $0x44] sm:$0xff] %v30
    %v1325 = vunpack.c.l.s4 269488144
    %v1326 = vunpack.c.0.s8 %v1325
    %v1327 = vlaneseq
    %v1328 = vshrl.u32 %v1327, 7
    %v1329 = vsub.s32 %v1326, %v1328
    %v1330 = vrot.slane %v1312, %v1329
    %v1332 = vunpack.c.l.s4 269488144
    %v1333 = vunpack.c.0.s8 %v1332
    %v1334 = vlaneseq
    %v1335 = vshrl.u32 %v1334, 7
    %v1336 = vsub.s32 %v1333, %v1335
    %v1337 = vrot.slane %v1313, %v1336
    %vm1338 = vcmask 1044484
    %v1339 = vsel %vm1338, %v1330, %v1330
    %vm1340 = vcmask 1046534
    %v1341 = vsel %vm1340, %v1330, %v1339
    %v1342 = vrot.slane %v1337, 7
    %vm1343 = vcmask 1041409
    %v1344 = vsel %vm1343, %v1342, %v1341
    %vm1345 = vcmask 1043459
    %v1346 = vsel %vm1345, %v1342, %v1344
    %vm1347 = vcmask 1045509
    %v1348 = vsel %vm1347, %v1342, %v1346
    %vm1349 = vcmask 1047559
    %v1350 = vsel %vm1349, %v1342, %v1348
    %1352 = vst [vmem:[#allocation5 + $0x10] sm:$0xf] %v1350
    %1353 = vst [vmem:[#allocation5 + $0x24] sm:$0xf] %v1350
    %1354 = vst [vmem:[#allocation5 + $0x38] sm:$0xf] %v1350
    %1355 = vst [vmem:[#allocation5 + $0x4c] sm:$0xf] %v1350
    // Predicated region
    $region10: #{tpu_custom_call.1} parent=1 // pred_check
      _
    $region11: #{tpu_custom_call.1} parent=1 // pred_check_branch
      %1357 = sbr.rel (0) target = $region13
    $region12: #{tpu_custom_call.1} parent=1 // pred_region
      %s1359 = ssub.s32 1280, 1280
      %1360 = vsyncadd [#allocation4], %s1359
      %s1361 = sshll.u32 [#allocation5], 4
      %s1362 = int_to_ptr.vmem [resolvable:$true] %s1361
      %1367 = dma.vmem_to_hbm [thread:$0]  %s1362, 1280, %s1, [#allocation4], 320, 320, 20
    $region13: #{tpu_custom_call.1} parent=1 // pred_fallthru
      _
    // Predicated region
    $region14: #{tpu_custom_call.1} parent=1 // pred_check
      _
    $region15: #{tpu_custom_call.1} parent=1 // pred_check_branch
      %1369 = sbr.rel (0) target = $region17
    $region16: #{tpu_custom_call.1} parent=1 // pred_region
      %1370 = dma.done [#allocation4], 1280
    $region17: #{tpu_custom_call.1} parent=1 // pred_fallthru
      _
    %1371 = vsyncpa [#allocation3], 1
    %1372 = vsyncpa [#allocation4], 1

</llo_original>
